<compile_context>
chip_gen: v7x
topology: tpu7x:2x2x1
jax: 0.10.0
libtpu: 0.0.40
codegen_flags: <defaults>
</compile_context>

<pallas_src>
import jax
import jax.numpy as jnp
from jax.experimental import pallas as pl
from jax.experimental.pallas import tpu as pltpu

_LANES = 128
_TARGET_BLOCK_BYTES = 1 << 20   # ~1 MiB per stream per buffer
_MIN_SPLIT_ROWS = 256           # split into >=2 blocks beyond this (v7x dual-TC)


def _rso_kernel(gamma_ref,
                pol_c_ref, pol_r_ref, ref_c_ref, ref_r_ref,
                loss_ref, chosen_ref, rejected_ref):
    gamma = gamma_ref[0, 0]  # f32 scalar from SMEM, broadcast on the VPU

    pol_c = pol_c_ref[...].astype(jnp.float32)
    pol_r = pol_r_ref[...].astype(jnp.float32)
    ref_c = ref_c_ref[...].astype(jnp.float32)
    ref_r = ref_r_ref[...].astype(jnp.float32)

    pi_logratios = pol_c - pol_r
    ref_logratios = ref_c - ref_r
    logits = pi_logratios - ref_logratios

    # hinge loss: relu(1 - gamma * logits)
    loss_ref[...] = jnp.maximum(1.0 - gamma * logits, 0.0).astype(loss_ref.dtype)
    # rewards (detach is a no-op in a pure forward pass)
    chosen_ref[...] = (gamma * (pol_c - ref_c)).astype(chosen_ref.dtype)
    rejected_ref[...] = (gamma * (pol_r - ref_r)).astype(rejected_ref.dtype)


def _round_up(x: int, m: int) -> int:
    return (x + m - 1) // m * m


def rso_loss(policy_chosen_logps,
             policy_rejected_logps,
             reference_chosen_logps,
             reference_rejected_logps,
             gamma: float = 0.1):
    """Pallas TPU implementation of RSOLoss.forward.

    All inputs have shape (batch,). Returns (losses, chosen_rewards,
    rejected_rewards), each of shape (batch,) and the input dtype.
    """
    b = policy_chosen_logps.shape[0]
    dtype = policy_chosen_logps.dtype
    itemsize = jnp.dtype(dtype).itemsize

    # Lane-dense layout: (rows, 128), rows a multiple of the sublane tile.
    row_mult = 8 * max(1, 4 // itemsize)          # 8 for f32, 16 for bf16/f16
    rows = _round_up(max(pl.cdiv(b, _LANES), 1), row_mult)
    padded = rows * _LANES
    needs_pad = padded != b

    # Per-stream DMA chunk ~1 MiB; ensure >=2 blocks for moderately sized
    # batches so both v7x TensorCores get work.
    max_block_rows = max(row_mult, _TARGET_BLOCK_BYTES // (_LANES * itemsize))
    if rows <= _MIN_SPLIT_ROWS:
        block_rows = rows
    else:
        block_rows = min(max_block_rows,
                         _round_up(pl.cdiv(rows, 2), row_mult))
    num_blocks = pl.cdiv(rows, block_rows)        # ragged last block is OK

    def to2d(x):
        if needs_pad:
            x = jnp.pad(x, (0, padded - b))
        return x.reshape(rows, _LANES)            # free bitcast

    args2d = [to2d(x) for x in (policy_chosen_logps,
                                policy_rejected_logps,
                                reference_chosen_logps,
                                reference_rejected_logps)]
    gamma_arr = jnp.full((1, 1), gamma, dtype=jnp.float32)

    data_spec = pl.BlockSpec((block_rows, _LANES), lambda i: (i, 0))
    gamma_spec = pl.BlockSpec(memory_space=pltpu.MemorySpace.SMEM)
    out_shape = jax.ShapeDtypeStruct((rows, _LANES), dtype)

    cost = pl.CostEstimate(flops=10 * padded,
                           transcendentals=0,
                           bytes_accessed=7 * itemsize * padded)

    losses, chosen, rejected = pl.pallas_call(
        _rso_kernel,
        grid=(num_blocks,),
        in_specs=[gamma_spec, data_spec, data_spec, data_spec, data_spec],
        out_specs=(data_spec, data_spec, data_spec),
        out_shape=(out_shape, out_shape, out_shape),
        compiler_params=pltpu.CompilerParams(
            dimension_semantics=("parallel",),
            vmem_limit_bytes=48 << 20),
        cost_estimate=cost,
    )(gamma_arr, *args2d)

    def to1d(x):
        x = x.reshape(padded)                     # free bitcast
        return x[:b] if needs_pad else x

    return to1d(losses), to1d(chosen), to1d(rejected)


def _reference(pc, pr, rc, rr, gamma=0.1):
    pc, pr, rc, rr = (x.astype(jnp.float32) for x in (pc, pr, rc, rr))
    logits = (pc - pr) - (rc - rr)
    losses = jnp.maximum(1.0 - gamma * logits, 0.0)
    return losses, gamma * (pc - rc), gamma * (pr - rr)


if __name__ == "__main__":
    key = jax.random.PRNGKey(0)
    gamma = 0.1

    # batch=8: pad path, single block.
    # batch=1024: zero-copy fast path (8 rows x 128 lanes, no pad, no slice).
    # batch=33742: 264 rows -> 2 blocks of 136 rows, ragged last block.
    test_cases = [(8, jnp.float32), (1024, jnp.float32),
                  (33742, jnp.float32), (8, jnp.bfloat16)]

    for batch, dtype in test_cases:
        k1, k2, k3, k4 = jax.random.split(jax.random.fold_in(key, batch), 4)
        # Log-probabilities are negative-ish values.
        policy_chosen = (-jax.random.uniform(k1, (batch,), jnp.float32) * 10.0).astype(dtype)
        policy_rejected = (-jax.random.uniform(k2, (batch,), jnp.float32) * 10.0).astype(dtype)
        reference_chosen = (-jax.random.uniform(k3, (batch,), jnp.float32) * 10.0).astype(dtype)
        reference_rejected = (-jax.random.uniform(k4, (batch,), jnp.float32) * 10.0).astype(dtype)

        losses, chosen_rewards, rejected_rewards = rso_loss(
            policy_chosen, policy_rejected, reference_chosen, reference_rejected,
            gamma=gamma)
        jax.block_until_ready((losses, chosen_rewards, rejected_rewards))

        ref_losses, ref_chosen, ref_rejected = _reference(
            policy_chosen, policy_rejected, reference_chosen, reference_rejected,
            gamma=gamma)

        atol = 1e-6 if dtype == jnp.float32 else 5e-2
        assert losses.shape == (batch,) and losses.dtype == dtype
        assert jnp.allclose(losses.astype(jnp.float32), ref_losses, atol=atol)
        assert jnp.allclose(chosen_rewards.astype(jnp.float32), ref_chosen, atol=atol)
        assert jnp.allclose(rejected_rewards.astype(jnp.float32), ref_rejected, atol=atol)

    print("KERNEL_OK")
</pallas_src>

<mosaic_0001>
module attributes {stable_mosaic.version = 11 : i64} {
  func.func @_rso_kernel(%arg0: i32, %arg1: memref<1x1xf32, #tpu.memory_space<smem>>, %arg2: memref<8x128xf32, #tpu.memory_space<vmem>>, %arg3: memref<8x128xf32, #tpu.memory_space<vmem>>, %arg4: memref<8x128xf32, #tpu.memory_space<vmem>>, %arg5: memref<8x128xf32, #tpu.memory_space<vmem>>, %arg6: memref<8x128xf32, #tpu.memory_space<vmem>>, %arg7: memref<8x128xf32, #tpu.memory_space<vmem>>, %arg8: memref<8x128xf32, #tpu.memory_space<vmem>>) attributes {dimension_semantics = [#tpu.dimension_semantics<parallel>], iteration_bounds = array<i64: 1>, scalar_prefetch = 0 : i64, scratch_operands = 0 : i64, tpu.core_type = #tpu.core_type<tc>, window_params = [{transform_indices = @transform_0, window_bounds = array<i64: 1, 1>}, {transform_indices = @transform_1, window_bounds = array<i64: 8, 128>}, {transform_indices = @transform_2, window_bounds = array<i64: 8, 128>}, {transform_indices = @transform_3, window_bounds = array<i64: 8, 128>}, {transform_indices = @transform_4, window_bounds = array<i64: 8, 128>}, {transform_indices = @transform_5, window_bounds = array<i64: 8, 128>}, {transform_indices = @transform_6, window_bounds = array<i64: 8, 128>}, {transform_indices = @transform_7, window_bounds = array<i64: 8, 128>}]} {
    %c0 = arith.constant 0 : index
    %c0_0 = arith.constant 0 : index
    %0 = memref.load %arg1[%c0, %c0_0] : memref<1x1xf32, #tpu.memory_space<smem>>
    %c0_1 = arith.constant 0 : index
    %c0_2 = arith.constant 0 : index
    %1 = vector.load %arg2[%c0_1, %c0_2] : memref<8x128xf32, #tpu.memory_space<vmem>>, vector<8x128xf32>
    %c0_3 = arith.constant 0 : index
    %c0_4 = arith.constant 0 : index
    %2 = vector.load %arg3[%c0_3, %c0_4] : memref<8x128xf32, #tpu.memory_space<vmem>>, vector<8x128xf32>
    %c0_5 = arith.constant 0 : index
    %c0_6 = arith.constant 0 : index
    %3 = vector.load %arg4[%c0_5, %c0_6] : memref<8x128xf32, #tpu.memory_space<vmem>>, vector<8x128xf32>
    %c0_7 = arith.constant 0 : index
    %c0_8 = arith.constant 0 : index
    %4 = vector.load %arg5[%c0_7, %c0_8] : memref<8x128xf32, #tpu.memory_space<vmem>>, vector<8x128xf32>
    %5 = arith.subf %1, %2 : vector<8x128xf32>
    %6 = arith.subf %3, %4 : vector<8x128xf32>
    %7 = arith.subf %5, %6 : vector<8x128xf32>
    %8 = vector.broadcast %0 : f32 to vector<8x128xf32>
    %9 = arith.mulf %8, %7 : vector<8x128xf32>
    %cst = arith.constant 1.000000e+00 : f32
    %10 = vector.broadcast %cst : f32 to vector<8x128xf32>
    %11 = arith.subf %10, %9 : vector<8x128xf32>
    %cst_9 = arith.constant 0.000000e+00 : f32
    %12 = vector.broadcast %cst_9 : f32 to vector<8x128xf32>
    %13 = arith.maximumf %11, %12 : vector<8x128xf32>
    %c0_10 = arith.constant 0 : index
    %c0_11 = arith.constant 0 : index
    %14 = vector.load %arg6[%c0_10, %c0_11] : memref<8x128xf32, #tpu.memory_space<vmem>>, vector<8x128xf32>
    tpu.vector_store %arg6[%c0_10, %c0_11], %13 {strides = array<i32>} : memref<8x128xf32, #tpu.memory_space<vmem>>, vector<8x128xf32>,
    %15 = arith.subf %1, %3 : vector<8x128xf32>
    %16 = vector.broadcast %0 : f32 to vector<8x128xf32>
    %17 = arith.mulf %16, %15 : vector<8x128xf32>
    %c0_12 = arith.constant 0 : index
    %c0_13 = arith.constant 0 : index
    %18 = vector.load %arg7[%c0_12, %c0_13] : memref<8x128xf32, #tpu.memory_space<vmem>>, vector<8x128xf32>
    tpu.vector_store %arg7[%c0_12, %c0_13], %17 {strides = array<i32>} : memref<8x128xf32, #tpu.memory_space<vmem>>, vector<8x128xf32>,
    %19 = arith.subf %2, %4 : vector<8x128xf32>
    %20 = vector.broadcast %0 : f32 to vector<8x128xf32>
    %21 = arith.mulf %20, %19 : vector<8x128xf32>
    %c0_14 = arith.constant 0 : index
    %c0_15 = arith.constant 0 : index
    %22 = vector.load %arg8[%c0_14, %c0_15] : memref<8x128xf32, #tpu.memory_space<vmem>>, vector<8x128xf32>
    tpu.vector_store %arg8[%c0_14, %c0_15], %21 {strides = array<i32>} : memref<8x128xf32, #tpu.memory_space<vmem>>, vector<8x128xf32>,
    return
  }
  func.func @transform_0(%arg0: i32) -> (i32, i32) {
    %c0_i32 = arith.constant 0 : i32
    %c0_i32_0 = arith.constant 0 : i32
    %c0_i32_1 = arith.constant 0 : i32
    return %c0_i32, %c0_i32_0 : i32, i32
  }
  func.func @transform_1(%arg0: i32) -> (i32, i32) {
    %c0_i32 = arith.constant 0 : i32
    %c0_i32_0 = arith.constant 0 : i32
    return %arg0, %c0_i32 : i32, i32
  }
  func.func @transform_2(%arg0: i32) -> (i32, i32) {
    %c0_i32 = arith.constant 0 : i32
    %c0_i32_0 = arith.constant 0 : i32
    return %arg0, %c0_i32 : i32, i32
  }
  func.func @transform_3(%arg0: i32) -> (i32, i32) {
    %c0_i32 = arith.constant 0 : i32
    %c0_i32_0 = arith.constant 0 : i32
    return %arg0, %c0_i32 : i32, i32
  }
  func.func @transform_4(%arg0: i32) -> (i32, i32) {
    %c0_i32 = arith.constant 0 : i32
    %c0_i32_0 = arith.constant 0 : i32
    return %arg0, %c0_i32 : i32, i32
  }
  func.func @transform_5(%arg0: i32) -> (i32, i32) {
    %c0_i32 = arith.constant 0 : i32
    %c0_i32_0 = arith.constant 0 : i32
    return %arg0, %c0_i32 : i32, i32
  }
  func.func @transform_6(%arg0: i32) -> (i32, i32) {
    %c0_i32 = arith.constant 0 : i32
    %c0_i32_0 = arith.constant 0 : i32
    return %arg0, %c0_i32 : i32, i32
  }
  func.func @transform_7(%arg0: i32) -> (i32, i32) {
    %c0_i32 = arith.constant 0 : i32
    %c0_i32_0 = arith.constant 0 : i32
    return %arg0, %c0_i32 : i32, i32
  }
}

</mosaic_0001>

<llo_original>
// kernel: tpu_custom_call.1
$region0: #{tpu_custom_call.1}
  #allocation0 [shape = 'u32[]', space=smem, size = 0x4, offset = 0x4, fixed_abs, tag = 'smem constant byte address 0x4 - core index']
  #allocation1 [shape = 'u32[144,128]{1,0:T(1,128)}', space=vmem, size = 0x12000, scoped, tag = 'internal scratch']
  #allocation2 [shape = 'f32[1,1]{1,0:T(1,128)S(6)}', space=smem, size = 0x200, scoped, tag = 'scoped memory for tpu_custom_call.1']
  %s0 = inlined_call_operand.<no memory space> [shape: f32[1,1], index: 0, kind: input, shape index: {}]
  %s1 = inlined_call_operand.hbm [shape: f32[8,128], index: 1, kind: input, shape index: {}]
  %s2 = inlined_call_operand.hbm [shape: f32[8,128], index: 2, kind: input, shape index: {}]
  %s3 = inlined_call_operand.vmem [shape: f32[8,128], index: 3, kind: input, shape index: {}]
  %s4 = inlined_call_operand.hbm [shape: f32[8,128], index: 4, kind: input, shape index: {}]
  %s5 = inlined_call_operand.hbm [shape: f32[8,128], index: 5, kind: output, shape index: {0}]
  %s6 = inlined_call_operand.hbm [shape: f32[8,128], index: 6, kind: output, shape index: {1}]
  %s7 = inlined_call_operand.hbm [shape: f32[8,128], index: 7, kind: output, shape index: {2}]
  %8 = xla_tuple %s5, %s6, %s7
  %s9 = sld [smem:[#allocation0]]
  $region58: #{tpu_custom_call.1} parent=0
    _
  %s11 = ssub.s32 1, %s9
  %s12 = scalar_select 0, %s11, %s9
  %13 = sst [smem:[#allocation2]] %s0
  $region1: #{tpu_custom_call.1} parent=0
    #allocation3 [shape = 'u8[4096]{0}', space=vmem, size = 0x1000, scoped, tag = 'input window, operand 1, single buffered']
    #allocation4 [shape = 's32[1]{0}', space=sflag, size = 0x4, scoped, tag = 'scoped memory for tpu_custom_call.1']
    #allocation5 [shape = 's32[1]{0}', space=sflag, size = 0x4, scoped, tag = 'scoped memory for tpu_custom_call.1']
    #allocation6 [shape = 'u8[4096]{0}', space=vmem, size = 0x1000, scoped, tag = 'input window, operand 2, single buffered']
    #allocation7 [shape = 's32[1]{0}', space=sflag, size = 0x4, scoped, tag = 'scoped memory for tpu_custom_call.1']
    #allocation8 [shape = 'u8[4096]{0}', space=vmem, size = 0x1000, scoped, tag = 'input window, operand 4, single buffered']
    #allocation9 [shape = 'u8[4096]{0}', space=vmem, size = 0x1000, scoped, tag = 'output window, operand 0, single buffered']
    #allocation10 [shape = 'u8[4096]{0}', space=vmem, size = 0x1000, scoped, tag = 'output window, operand 1, single buffered']
    #allocation11 [shape = 's32[1]{0}', space=sflag, size = 0x4, scoped, tag = 'scoped memory for tpu_custom_call.1']
    #allocation12 [shape = 'u8[4096]{0}', space=vmem, size = 0x1000, scoped, tag = 'output window, operand 2, single buffered']
    %14 = vsyncpa [#allocation4], 0
    %15 = vsyncpa [#allocation7], 0
    %16 = vsyncpa [#allocation5], 0
    %17 = vsyncpa [#allocation11], 0
    // Predicated region
    $region2: #{tpu_custom_call.1} parent=1 // pred_check
      _
    $region3: #{tpu_custom_call.1} parent=1 // pred_check_branch
      %19 = sbr.rel (0) target = $region5
    $region4: #{tpu_custom_call.1} parent=1 // pred_region
      _
    $region5: #{tpu_custom_call.1} parent=1 // pred_fallthru
      _
    // Predicated region
    $region6: #{tpu_custom_call.1} parent=1 // pred_check
      _
    $region7: #{tpu_custom_call.1} parent=1 // pred_check_branch
      %21 = sbr.rel (0) target = $region9
    $region8: #{tpu_custom_call.1} parent=1 // pred_region
      %s23 = ssub.s32 128, 128
      %24 = vsyncadd [#allocation4], %s23
      %s26 = sshll.u32 [#allocation3], 4
      %s27 = int_to_ptr.vmem [resolvable:$true] %s26
      %29 = dma.hbm_to_vmem [thread:$0]  %s1, 128, %s27, [#allocation4]
    $region9: #{tpu_custom_call.1} parent=1 // pred_fallthru
      _
    // Predicated region
    $region10: #{tpu_custom_call.1} parent=1 // pred_check
      _
    $region11: #{tpu_custom_call.1} parent=1 // pred_check_branch
      %31 = sbr.rel (0) target = $region13
    $region12: #{tpu_custom_call.1} parent=1 // pred_region
      %s33 = ssub.s32 128, 128
      %34 = vsyncadd [#allocation7], %s33
      %s36 = sshll.u32 [#allocation6], 4
      %s37 = int_to_ptr.vmem [resolvable:$true] %s36
      %39 = dma.hbm_to_vmem [thread:$0]  %s2, 128, %s37, [#allocation7]
    $region13: #{tpu_custom_call.1} parent=1 // pred_fallthru
      _
    // Predicated region
    $region14: #{tpu_custom_call.1} parent=1 // pred_check
      _
    $region15: #{tpu_custom_call.1} parent=1 // pred_check_branch
      %41 = sbr.rel (0) target = $region17
    $region16: #{tpu_custom_call.1} parent=1 // pred_region
      _
    $region17: #{tpu_custom_call.1} parent=1 // pred_fallthru
      _
    // Predicated region
    $region18: #{tpu_custom_call.1} parent=1 // pred_check
      _
    $region19: #{tpu_custom_call.1} parent=1 // pred_check_branch
      %43 = sbr.rel (0) target = $region21
    $region20: #{tpu_custom_call.1} parent=1 // pred_region
      %s45 = ssub.s32 128, 128
      %46 = vsyncadd [#allocation7], %s45
      %s48 = sshll.u32 [#allocation8], 4
      %s49 = int_to_ptr.vmem [resolvable:$true] %s48
      %51 = dma.hbm_to_vmem [thread:$0]  %s4, 128, %s49, [#allocation7]
    $region21: #{tpu_custom_call.1} parent=1 // pred_fallthru
      _
    // Predicated region
    $region22: #{tpu_custom_call.1} parent=1 // pred_check
      _
    $region23: #{tpu_custom_call.1} parent=1 // pred_check_branch
      %53 = sbr.rel (0) target = $region25
    $region24: #{tpu_custom_call.1} parent=1 // pred_region
      %54 = dma.done [#allocation4], 128
    $region25: #{tpu_custom_call.1} parent=1 // pred_fallthru
      _
    // Predicated region
    $region26: #{tpu_custom_call.1} parent=1 // pred_check
      _
    $region27: #{tpu_custom_call.1} parent=1 // pred_check_branch
      %56 = sbr.rel (0) target = $region29
    $region28: #{tpu_custom_call.1} parent=1 // pred_region
      %57 = dma.done [#allocation7], 128
    $region29: #{tpu_custom_call.1} parent=1 // pred_fallthru
      _
    // Predicated region
    $region30: #{tpu_custom_call.1} parent=1 // pred_check
      _
    $region31: #{tpu_custom_call.1} parent=1 // pred_check_branch
      %59 = sbr.rel (0) target = $region33
    $region32: #{tpu_custom_call.1} parent=1 // pred_region
      %60 = dma.done [#allocation7], 128
    $region33: #{tpu_custom_call.1} parent=1 // pred_fallthru
      _
    %s61 = sld [smem:[#allocation2]]
    %v62 = vld [vmem:[#allocation3] sm:$0xff]
    %v63 = vld [vmem:[#allocation6] sm:$0xff]
    %v64 = vld [vmem:[%s3] sm:$0xff]
    %v65 = vld [vmem:[#allocation8] sm:$0xff]
    %v66 = vsub.f32 %v62, %v63
    %v67 = vsub.f32 %v64, %v65
    %v68 = vsub.f32 %v66, %v67
    %v69 = vstv %s61
    %v70 = vmul.f32 %v69, %v68
    %v71 = vsub.f32 1.0, %v70
    %v72 = vmax.f32 %v71, 0.0
    %73 = vst [vmem:[#allocation9] sm:$0xff] %v72
    %v74 = vsub.f32 %v62, %v64
    %v75 = vmul.f32 %v69, %v74
    %76 = vst [vmem:[#allocation10] sm:$0xff] %v75
    %v77 = vsub.f32 %v63, %v65
    %v78 = vmul.f32 %v69, %v77
    %79 = vst [vmem:[#allocation12] sm:$0xff] %v78
    // Predicated region
    $region34: #{tpu_custom_call.1} parent=1 // pred_check
      _
    $region35: #{tpu_custom_call.1} parent=1 // pred_check_branch
      %81 = sbr.rel (0) target = $region37
    $region36: #{tpu_custom_call.1} parent=1 // pred_region
      %s83 = ssub.s32 128, 128
      %84 = vsyncadd [#allocation5], %s83
      %s86 = sshll.u32 [#allocation9], 4
      %s87 = int_to_ptr.vmem [resolvable:$true] %s86
      %89 = dma.vmem_to_hbm [thread:$0]  %s87, 128, %s5, [#allocation5]
    $region37: #{tpu_custom_call.1} parent=1 // pred_fallthru
      _
    // Predicated region
    $region38: #{tpu_custom_call.1} parent=1 // pred_check
      _
    $region39: #{tpu_custom_call.1} parent=1 // pred_check_branch
      %91 = sbr.rel (0) target = $region41
    $region40: #{tpu_custom_call.1} parent=1 // pred_region
      %s93 = ssub.s32 128, 128
      %94 = vsyncadd [#allocation11], %s93
      %s96 = sshll.u32 [#allocation10], 4
      %s97 = int_to_ptr.vmem [resolvable:$true] %s96
      %99 = dma.vmem_to_hbm [thread:$0]  %s97, 128, %s6, [#allocation11]
    $region41: #{tpu_custom_call.1} parent=1 // pred_fallthru
      _
    // Predicated region
    $region42: #{tpu_custom_call.1} parent=1 // pred_check
      _
    $region43: #{tpu_custom_call.1} parent=1 // pred_check_branch
      %101 = sbr.rel (0) target = $region45
    $region44: #{tpu_custom_call.1} parent=1 // pred_region
      %s103 = ssub.s32 128, 128
      %104 = vsyncadd [#allocation11], %s103
      %s106 = sshll.u32 [#allocation12], 4
      %s107 = int_to_ptr.vmem [resolvable:$true] %s106
      %109 = dma.vmem_to_hbm [thread:$0]  %s107, 128, %s7, [#allocation11]
    $region45: #{tpu_custom_call.1} parent=1 // pred_fallthru
      _
    // Predicated region
    $region46: #{tpu_custom_call.1} parent=1 // pred_check
      _
    $region47: #{tpu_custom_call.1} parent=1 // pred_check_branch
      %111 = sbr.rel (0) target = $region49
    $region48: #{tpu_custom_call.1} parent=1 // pred_region
      %112 = dma.done [#allocation5], 128
    $region49: #{tpu_custom_call.1} parent=1 // pred_fallthru
      _
    // Predicated region
    $region50: #{tpu_custom_call.1} parent=1 // pred_check
      _
    $region51: #{tpu_custom_call.1} parent=1 // pred_check_branch
      %114 = sbr.rel (0) target = $region53
    $region52: #{tpu_custom_call.1} parent=1 // pred_region
      %115 = dma.done [#allocation11], 128
    $region53: #{tpu_custom_call.1} parent=1 // pred_fallthru
      _
    // Predicated region
    $region54: #{tpu_custom_call.1} parent=1 // pred_check
      _
    $region55: #{tpu_custom_call.1} parent=1 // pred_check_branch
      %117 = sbr.rel (0) target = $region57
    $region56: #{tpu_custom_call.1} parent=1 // pred_region
      %118 = dma.done [#allocation11], 128
    $region57: #{tpu_custom_call.1} parent=1 // pred_fallthru
      _
    %119 = vsyncpa [#allocation4], 1
    %120 = vsyncpa [#allocation7], 1
    %121 = vsyncpa [#allocation5], 1
    %122 = vsyncpa [#allocation11], 1

</llo_original>
